<compile_context>
chip_gen: v5e
topology: v5e:2x2
jax: 0.10.0
libtpu: 0.0.40
codegen_flags: <defaults>
</compile_context>

<pallas_src>
import functools
import math

import jax
import jax.numpy as jnp
from jax import lax
from jax.experimental import pallas as pl
from jax.experimental.pallas import tpu as pltpu

D_IN = 29
D_H1 = 22
D_LAT = 16
FEAT_PAD = 32        # every feature axis padded to 32 (sublane friendly)
_COL_CHUNK = 512     # batch columns per inner-loop step


def _round_up(n, m):
    return ((n + m - 1) // m) * m


def _autoencoder_kernel(x_ref, w_ref, b_ref, o_ref, *, chunk):
    # Packed grid-resident params: w_ref (4*32, 32), b_ref (4*32, 1).
    w1 = w_ref[0 * FEAT_PAD:1 * FEAT_PAD, :]
    w2 = w_ref[1 * FEAT_PAD:2 * FEAT_PAD, :]
    w3 = w_ref[2 * FEAT_PAD:3 * FEAT_PAD, :]
    w4 = w_ref[3 * FEAT_PAD:4 * FEAT_PAD, :]
    b1 = b_ref[0 * FEAT_PAD:1 * FEAT_PAD, :]
    b2 = b_ref[1 * FEAT_PAD:2 * FEAT_PAD, :]
    b3 = b_ref[2 * FEAT_PAD:3 * FEAT_PAD, :]
    b4 = b_ref[3 * FEAT_PAD:4 * FEAT_PAD, :]

    n_chunks = x_ref.shape[1] // chunk
    hi = jax.lax.Precision.HIGHEST

    def body(c, carry):
        start = pl.multiple_of(c * chunk, chunk)
        xt = x_ref[:, pl.ds(start, chunk)]                                  # (32, chunk)
        # encoder: Linear(29, 22) -> ReLU -> Linear(22, 16)   (transposed math)
        h1 = jnp.dot(w1, xt, preferred_element_type=jnp.float32, precision=hi) + b1
        h1 = jnp.maximum(h1, 0.0)
        z = jnp.dot(w2, h1, preferred_element_type=jnp.float32, precision=hi) + b2
        # decoder: Linear(16, 22) -> ReLU -> Linear(22, 29) -> Tanh
        d1 = jnp.dot(w3, z, preferred_element_type=jnp.float32, precision=hi) + b3
        d1 = jnp.maximum(d1, 0.0)
        y = jnp.dot(w4, d1, preferred_element_type=jnp.float32, precision=hi) + b4
        o_ref[:, pl.ds(start, chunk)] = jnp.tanh(y).astype(o_ref.dtype)
        return carry

    lax.fori_loop(0, n_chunks, body, 0, unroll=(n_chunks <= 8))


def autoencoder_forward(x, packed_params, *, batch_tile=8192, out_dtype=None):
    """x: [B, 29] (f32 or bf16). packed_params: (w_all (128,32) f32, b_all (128,1) f32)."""
    B, F = x.shape
    assert F == D_IN
    w_all, b_all = packed_params
    if out_dtype is None:
        out_dtype = x.dtype

    # Lane-dense tile (batch columns, multiple of 128).  Cap at ceil(B/2) so a
    # large batch always yields >= 2 grid steps (v7x megacore), and cap the
    # double-buffered in+out VMEM footprint to ~40 MiB.
    itemsize = jnp.dtype(x.dtype).itemsize + jnp.dtype(out_dtype).itemsize
    vmem_cap_tile = ((40 << 20) // (2 * FEAT_PAD * itemsize) // 128) * 128
    tile = min(_round_up(batch_tile, 128),
               max(128, _round_up(pl.cdiv(B, 2), 128)),
               max(128, vmem_cap_tile))
    chunk = math.gcd(tile, _COL_CHUNK)
    B_pad = _round_up(B, tile)

    # TODO(synk): callers that can produce/consume [features, batch]-major data
    # directly can skip these two host-side transposes entirely.
    x_t = jnp.pad(x.T, ((0, FEAT_PAD - D_IN), (0, B_pad - B)))              # (32, B_pad)

    in_bytes = FEAT_PAD * tile * jnp.dtype(x.dtype).itemsize
    out_bytes = FEAT_PAD * tile * jnp.dtype(out_dtype).itemsize
    vmem_limit = int(min(max(3 * (in_bytes + out_bytes), 32 << 20), 48 << 20))

    kernel = functools.partial(_autoencoder_kernel, chunk=chunk)
    out_t = pl.pallas_call(
        kernel,
        out_shape=jax.ShapeDtypeStruct((FEAT_PAD, B_pad), out_dtype),
        grid_spec=pltpu.PrefetchScalarGridSpec(
            num_scalar_prefetch=0,
            grid=(B_pad // tile,),
            in_specs=[
                pl.BlockSpec((FEAT_PAD, tile), lambda i: (0, i)),   # x^T tile (lane-dense)
                pl.BlockSpec(w_all.shape, lambda i: (0, 0)),        # packed weights (resident)
                pl.BlockSpec(b_all.shape, lambda i: (0, 0)),        # packed biases  (resident)
            ],
            out_specs=pl.BlockSpec((FEAT_PAD, tile), lambda i: (0, i)),
        ),
        compiler_params=pltpu.CompilerParams(
            dimension_semantics=("parallel",),
            vmem_limit_bytes=vmem_limit),
    )(x_t, w_all, b_all)

    return out_t[:D_IN, :B].T


def pack_params(params):
    """params: [(W,b)]*4 in PyTorch layout (W: [out,in], b: [out]).  Zero-pad to 32 and pack."""
    w_all = jnp.zeros((4 * FEAT_PAD, FEAT_PAD), jnp.float32)
    b_all = jnp.zeros((4 * FEAT_PAD, 1), jnp.float32)
    for i, (w, b) in enumerate(params):
        out_d, in_d = w.shape
        w_all = w_all.at[i * FEAT_PAD:i * FEAT_PAD + out_d, :in_d].set(w.astype(jnp.float32))
        b_all = b_all.at[i * FEAT_PAD:i * FEAT_PAD + out_d, 0].set(b.astype(jnp.float32))
    return w_all, b_all


def init_params(key):
    """Deterministic init mirroring nn.Linear (PyTorch layout: W [out,in], b [out])."""
    def linear(k, in_d, out_d):
        kw, kb = jax.random.split(k)
        bound = 1.0 / math.sqrt(in_d)
        w = jax.random.uniform(kw, (out_d, in_d), jnp.float32, -bound, bound)
        b = jax.random.uniform(kb, (out_d,), jnp.float32, -bound, bound)
        return w, b

    k1, k2, k3, k4 = jax.random.split(key, 4)
    return [linear(k1, D_IN, D_H1),    # encoder Linear(29, 22)
            linear(k2, D_H1, D_LAT),   # encoder Linear(22, 16)
            linear(k3, D_LAT, D_H1),   # decoder Linear(16, 22)
            linear(k4, D_H1, D_IN)]    # decoder Linear(22, 29)


def reference_forward(x, params):
    hi = jax.lax.Precision.HIGHEST
    (w1, b1), (w2, b2), (w3, b3), (w4, b4) = params
    h = jnp.maximum(jnp.dot(x, w1.T, precision=hi) + b1, 0.0)
    z = jnp.dot(h, w2.T, precision=hi) + b2
    d = jnp.maximum(jnp.dot(z, w3.T, precision=hi) + b3, 0.0)
    return jnp.tanh(jnp.dot(d, w4.T, precision=hi) + b4)


if __name__ == "__main__":
    key = jax.random.PRNGKey(0)
    kx, kp = jax.random.split(key)
    params = init_params(kp)
    packed = pack_params(params)

    # Ragged small batch -> single grid step, single inner chunk.
    x = jax.random.normal(kx, (37, D_IN), jnp.float32)
    out = jax.block_until_ready(autoencoder_forward(x, packed))
    ref = reference_forward(x, params)
    assert out.shape == (37, D_IN)
    assert jnp.allclose(out, ref, atol=1e-4, rtol=1e-4)

    # Larger ragged batch with a small tile cap -> multi-step grid (padding + chunking).
    x2 = jax.random.normal(jax.random.PRNGKey(1), (300, D_IN), jnp.float32)
    out2 = jax.block_until_ready(autoencoder_forward(x2, packed, batch_tile=128))
    ref2 = reference_forward(x2, params)
    assert out2.shape == (300, D_IN)
    assert jnp.allclose(out2, ref2, atol=1e-4, rtol=1e-4)

    # End-to-end bf16 streams (caller supplies bf16 x; bf16 out, f32 compute in-register).
    x3 = x2.astype(jnp.bfloat16)
    out3 = jax.block_until_ready(autoencoder_forward(x3, packed))
    assert out3.dtype == jnp.bfloat16
    assert jnp.allclose(out3.astype(jnp.float32), ref2, atol=6e-2, rtol=6e-2)

    print("KERNEL_OK")
</pallas_src>

<mosaic_0001>
module attributes {stable_mosaic.version = 11 : i64} {
  func.func @_autoencoder_kernel(%arg0: i32, %arg1: memref<32x128xf32, #tpu.memory_space<vmem>>, %arg2: memref<128x32xf32, #tpu.memory_space<vmem>>, %arg3: memref<128x1xf32, #tpu.memory_space<vmem>>, %arg4: memref<32x128xf32, #tpu.memory_space<vmem>>) attributes {dimension_semantics = [#tpu.dimension_semantics<parallel>], iteration_bounds = array<i64: 1>, scalar_prefetch = 0 : i64, scratch_operands = 0 : i64, tpu.core_type = #tpu.core_type<tc>, window_params = [{transform_indices = @transform_0, window_bounds = array<i64: 32, 128>}, {pipeline_mode = #tpu.pipeline_mode<synchronous>, transform_indices = @transform_1, window_bounds = array<i64: 128, 32>}, {pipeline_mode = #tpu.pipeline_mode<synchronous>, transform_indices = @transform_2, window_bounds = array<i64: 128, 1>}, {transform_indices = @transform_3, window_bounds = array<i64: 32, 128>}]} {
    %c0 = arith.constant 0 : index
    %c0_0 = arith.constant 0 : index
    %0 = vector.load %arg2[%c0, %c0_0] : memref<128x32xf32, #tpu.memory_space<vmem>>, vector<32x32xf32>
    %c32 = arith.constant 32 : index
    %c0_1 = arith.constant 0 : index
    %1 = vector.load %arg2[%c32, %c0_1] : memref<128x32xf32, #tpu.memory_space<vmem>>, vector<32x32xf32>
    %c64 = arith.constant 64 : index
    %c0_2 = arith.constant 0 : index
    %2 = vector.load %arg2[%c64, %c0_2] : memref<128x32xf32, #tpu.memory_space<vmem>>, vector<32x32xf32>
    %c96 = arith.constant 96 : index
    %c0_3 = arith.constant 0 : index
    %3 = vector.load %arg2[%c96, %c0_3] : memref<128x32xf32, #tpu.memory_space<vmem>>, vector<32x32xf32>
    %c0_4 = arith.constant 0 : index
    %c0_5 = arith.constant 0 : index
    %4 = vector.load %arg3[%c0_4, %c0_5] : memref<128x1xf32, #tpu.memory_space<vmem>>, vector<32x1xf32>
    %c32_6 = arith.constant 32 : index
    %c0_7 = arith.constant 0 : index
    %5 = vector.load %arg3[%c32_6, %c0_7] : memref<128x1xf32, #tpu.memory_space<vmem>>, vector<32x1xf32>
    %c64_8 = arith.constant 64 : index
    %c0_9 = arith.constant 0 : index
    %6 = vector.load %arg3[%c64_8, %c0_9] : memref<128x1xf32, #tpu.memory_space<vmem>>, vector<32x1xf32>
    %c96_10 = arith.constant 96 : index
    %c0_11 = arith.constant 0 : index
    %7 = vector.load %arg3[%c96_10, %c0_11] : memref<128x1xf32, #tpu.memory_space<vmem>>, vector<32x1xf32>
    %c0_i32 = arith.constant 0 : i32
    %c128_i32 = arith.constant 128 : i32
    %8 = arith.muli %c0_i32, %c128_i32 : i32
    %9 = tpu.assume_multiple %8, 128 : i32
    %c0_12 = arith.constant 0 : index
    %10 = arith.index_cast %9 : i32 to index
    %11 = vector.load %arg1[%c0_12, %10] : memref<32x128xf32, #tpu.memory_space<vmem>>, vector<32x128xf32>
    %cst = arith.constant dense<0.000000e+00> : vector<32x128xf32>
    %12 = tpu.matmul %0, %11, %cst {dimension_numbers = #tpu.dot_dimension_numbers<[1], [0], [0], [1], [0, 0, 1, 1], [], []>, precision = #tpu.contract_precision<fp32>} : vector<32x32xf32>, vector<32x128xf32>, vector<32x128xf32> -> vector<32x128xf32>
    %13 = vector.broadcast %4 : vector<32x1xf32> to vector<32x128xf32>
    %14 = arith.addf %12, %13 : vector<32x128xf32>
    %cst_13 = arith.constant 0.000000e+00 : f32
    %15 = vector.broadcast %cst_13 : f32 to vector<32x128xf32>
    %16 = arith.maximumf %14, %15 : vector<32x128xf32>
    %cst_14 = arith.constant dense<0.000000e+00> : vector<32x128xf32>
    %17 = tpu.matmul %1, %16, %cst_14 {dimension_numbers = #tpu.dot_dimension_numbers<[1], [0], [0], [1], [0, 0, 1, 1], [], []>, precision = #tpu.contract_precision<fp32>} : vector<32x32xf32>, vector<32x128xf32>, vector<32x128xf32> -> vector<32x128xf32>
    %18 = vector.broadcast %5 : vector<32x1xf32> to vector<32x128xf32>
    %19 = arith.addf %17, %18 : vector<32x128xf32>
    %cst_15 = arith.constant dense<0.000000e+00> : vector<32x128xf32>
    %20 = tpu.matmul %2, %19, %cst_15 {dimension_numbers = #tpu.dot_dimension_numbers<[1], [0], [0], [1], [0, 0, 1, 1], [], []>, precision = #tpu.contract_precision<fp32>} : vector<32x32xf32>, vector<32x128xf32>, vector<32x128xf32> -> vector<32x128xf32>
    %21 = vector.broadcast %6 : vector<32x1xf32> to vector<32x128xf32>
    %22 = arith.addf %20, %21 : vector<32x128xf32>
    %cst_16 = arith.constant 0.000000e+00 : f32
    %23 = vector.broadcast %cst_16 : f32 to vector<32x128xf32>
    %24 = arith.maximumf %22, %23 : vector<32x128xf32>
    %cst_17 = arith.constant dense<0.000000e+00> : vector<32x128xf32>
    %25 = tpu.matmul %3, %24, %cst_17 {dimension_numbers = #tpu.dot_dimension_numbers<[1], [0], [0], [1], [0, 0, 1, 1], [], []>, precision = #tpu.contract_precision<fp32>} : vector<32x32xf32>, vector<32x128xf32>, vector<32x128xf32> -> vector<32x128xf32>
    %26 = vector.broadcast %7 : vector<32x1xf32> to vector<32x128xf32>
    %27 = arith.addf %25, %26 : vector<32x128xf32>
    %28 = math.tanh %27 : vector<32x128xf32>
    %c0_18 = arith.constant 0 : index
    %29 = arith.index_cast %9 : i32 to index
    %30 = vector.load %arg4[%c0_18, %29] : memref<32x128xf32, #tpu.memory_space<vmem>>, vector<32x128xf32>
    tpu.vector_store %arg4[%c0_18, %29], %28 {strides = array<i32>} : memref<32x128xf32, #tpu.memory_space<vmem>>, vector<32x128xf32>,
    %c1_i32 = arith.constant 1 : i32
    return
  }
  func.func @transform_0(%arg0: i32) -> (i32, i32) {
    %c0_i32 = arith.constant 0 : i32
    %c0_i32_0 = arith.constant 0 : i32
    return %c0_i32, %arg0 : i32, i32
  }
  func.func @transform_1(%arg0: i32) -> (i32, i32) {
    %c0_i32 = arith.constant 0 : i32
    %c0_i32_0 = arith.constant 0 : i32
    %c0_i32_1 = arith.constant 0 : i32
    return %c0_i32, %c0_i32_0 : i32, i32
  }
  func.func @transform_2(%arg0: i32) -> (i32, i32) {
    %c0_i32 = arith.constant 0 : i32
    %c0_i32_0 = arith.constant 0 : i32
    %c0_i32_1 = arith.constant 0 : i32
    return %c0_i32, %c0_i32_0 : i32, i32
  }
  func.func @transform_3(%arg0: i32) -> (i32, i32) {
    %c0_i32 = arith.constant 0 : i32
    %c0_i32_0 = arith.constant 0 : i32
    return %c0_i32, %arg0 : i32, i32
  }
}

</mosaic_0001>

<llo_original>
// kernel: tpu_custom_call.1
$region0: #{tpu_custom_call.1}
  #allocation0 [shape = 'u32[]', space=smem, size = 0x4, offset = 0x4, fixed_abs, tag = 'smem constant byte address 0x4 - core index']
  #allocation1 [shape = 'u32[72,128]{1,0:T(1,128)}', space=vmem, size = 0x9000, scoped, tag = 'internal scratch']
  %s0 = inlined_call_operand.vmem [shape: f32[32,128], index: 0, kind: input, shape index: {}]
  %s1 = inlined_call_operand.vmem [shape: f32[128,32], index: 1, kind: input, shape index: {}]
  %s2 = inlined_call_operand.vmem [shape: f32[128,1], index: 2, kind: input, shape index: {}]
  %s3 = inlined_call_operand.hbm [shape: f32[32,128], index: 3, kind: output, shape index: {}]
  %s4 = sld [smem:[#allocation0]]
  $region22: #{tpu_custom_call.1} parent=0
    _
  %s6 = ssub.s32 1, %s4
  %s7 = scalar_select 0, %s6, %s4
  $region1: #{tpu_custom_call.1} parent=0
    #allocation2 [shape = 'u8[16384]{0}', space=vmem, size = 0x4000, scoped, tag = 'output window, operand 0, single buffered']
    #allocation3 [shape = 's32[1]{0}', space=sflag, size = 0x4, scoped, tag = 'scoped memory for tpu_custom_call.1']
    %8 = vsyncpa [#allocation3], 0
    // Predicated region
    $region2: #{tpu_custom_call.1} parent=1 // pred_check
      _
    $region3: #{tpu_custom_call.1} parent=1 // pred_check_branch
      %10 = sbr.rel (0) target = $region5
    $region4: #{tpu_custom_call.1} parent=1 // pred_region
      _
    $region5: #{tpu_custom_call.1} parent=1 // pred_fallthru
      _
    // Predicated region
    $region6: #{tpu_custom_call.1} parent=1 // pred_check
      _
    $region7: #{tpu_custom_call.1} parent=1 // pred_check_branch
      %12 = sbr.rel (0) target = $region9
    $region8: #{tpu_custom_call.1} parent=1 // pred_region
      _
    $region9: #{tpu_custom_call.1} parent=1 // pred_fallthru
      _
    // Predicated region
    $region10: #{tpu_custom_call.1} parent=1 // pred_check
      _
    $region11: #{tpu_custom_call.1} parent=1 // pred_check_branch
      %14 = sbr.rel (0) target = $region13
    $region12: #{tpu_custom_call.1} parent=1 // pred_region
      _
    $region13: #{tpu_custom_call.1} parent=1 // pred_fallthru
      _
    %v15 = vld [vmem:[%s1] sm:$0xff]
    %v16 = vld [vmem:[%s1 + $0x8] sm:$0xff]
    %v17 = vld [vmem:[%s1 + $0x10] sm:$0xff]
    %v18 = vld [vmem:[%s1 + $0x18] sm:$0xff]
    %v19 = vld [vmem:[%s1 + $0x20] sm:$0xff]
    %v20 = vld [vmem:[%s1 + $0x28] sm:$0xff]
    %v21 = vld [vmem:[%s1 + $0x30] sm:$0xff]
    %v22 = vld [vmem:[%s1 + $0x38] sm:$0xff]
    %v23 = vld [vmem:[%s1 + $0x40] sm:$0xff]
    %v24 = vld [vmem:[%s1 + $0x48] sm:$0xff]
    %v25 = vld [vmem:[%s1 + $0x50] sm:$0xff]
    %v26 = vld [vmem:[%s1 + $0x58] sm:$0xff]
    %v27 = vld [vmem:[%s1 + $0x60] sm:$0xff]
    %v28 = vld [vmem:[%s1 + $0x68] sm:$0xff]
    %v29 = vld [vmem:[%s1 + $0x70] sm:$0xff]
    %v30 = vld [vmem:[%s1 + $0x78] sm:$0xff]
    %v31 = vld [vmem:[%s2] sm:$0xff]
    %v32 = vld [vmem:[%s2 + $0x8] sm:$0xff]
    %v33 = vld [vmem:[%s2 + $0x10] sm:$0xff]
    %v34 = vld [vmem:[%s2 + $0x18] sm:$0xff]
    %v35 = vld [vmem:[%s2 + $0x20] sm:$0xff]
    %v36 = vld [vmem:[%s2 + $0x28] sm:$0xff]
    %v37 = vld [vmem:[%s2 + $0x30] sm:$0xff]
    %v38 = vld [vmem:[%s2 + $0x38] sm:$0xff]
    %v39 = vld [vmem:[%s2 + $0x40] sm:$0xff]
    %v40 = vld [vmem:[%s2 + $0x48] sm:$0xff]
    %v41 = vld [vmem:[%s2 + $0x50] sm:$0xff]
    %v42 = vld [vmem:[%s2 + $0x58] sm:$0xff]
    %v43 = vld [vmem:[%s2 + $0x60] sm:$0xff]
    %v44 = vld [vmem:[%s2 + $0x68] sm:$0xff]
    %v45 = vld [vmem:[%s2 + $0x70] sm:$0xff]
    %v46 = vld [vmem:[%s2 + $0x78] sm:$0xff]
    %v47 = vld [vmem:[%s0] sm:$0xff]
    %v48 = vld [vmem:[%s0 + $0x8] sm:$0xff]
    %v49 = vld [vmem:[%s0 + $0x10] sm:$0xff]
    %v50 = vld [vmem:[%s0 + $0x18] sm:$0xff]
    %52 = vset.pattern.permute.xlu0 0
    %53 = vperm.xlu0 %52, %v31
    %v54 = vpop.permute.xlu0 %53
    %57 = vset.pattern.permute.xlu0 0
    %58 = vperm.xlu0 %57, %v32
    %v59 = vpop.permute.xlu0 %58
    %62 = vset.pattern.permute.xlu0 0
    %63 = vperm.xlu0 %62, %v33
    %v64 = vpop.permute.xlu0 %63
    %67 = vset.pattern.permute.xlu0 0
    %68 = vperm.xlu0 %67, %v34
    %v69 = vpop.permute.xlu0 %68
    %vm71 = vcmask 261120
    %v73 = vsel %vm71, %v15, 0
    %v76 = vsel %vm71, %v16, 0
    %v79 = vsel %vm71, %v17, 0
    %v82 = vsel %vm71, %v18, 0
    %84 = vmatpush.msra.mxu0 0.0
    %85 = vmatpush.msra.mxu0 0.0
    %86 = vmatpush.msra.mxu0 0.0
    %87 = vmatpush.msra.mxu0 0.0
    %88 = vmatpush.msra.mxu0 0.0
    %89 = vmatpush.msra.mxu0 0.0
    %90 = vmatpush.msra.mxu0 0.0
    %91 = vmatpush.msra.mxu0 0.0
    %92 = vmatpush.msra.mxu0 0.0
    %93 = vmatpush.msra.mxu0 0.0
    %94 = vmatpush.msra.mxu0 0.0
    %95 = vmatpush.msra.mxu0 0.0
    %v96 = vand.u32 %v50, 4294901760
    %97 = vmatpush.msra.mxu0 %v96
    %v98 = vand.u32 %v49, 4294901760
    %99 = vmatpush.msra.mxu0 %v98
    %v100 = vand.u32 %v48, 4294901760
    %101 = vmatpush.msra.mxu0 %v100
    %v102 = vand.u32 %v47, 4294901760
    %103 = vmatpush.msra.mxu0 %v102
    %v104 = vand.u32 %v73, 4294901760
    %v105 = vsub.f32 %v73, %v104
    %v106 = vand.u32 %v105, 4294901760
    %v107 = vsub.f32 %v105, %v106
    %v108 = vand.u32 %v107, 4294901760
    %109 = vmatmul.f32.gmra.mxu0 %v108
    %v110 = vpop.f32.mrf.mxu0
    %v111 = vadd.f32 %v54, %v110
    %v112 = vand.u32 %v76, 4294901760
    %v113 = vsub.f32 %v76, %v112
    %v114 = vand.u32 %v113, 4294901760
    %v115 = vsub.f32 %v113, %v114
    %v116 = vand.u32 %v115, 4294901760
    %117 = vmatmul.f32.gmra.mxu0 %v116
    %v118 = vpop.f32.mrf.mxu0
    %v119 = vadd.f32 %v59, %v118
    %v120 = vand.u32 %v79, 4294901760
    %v121 = vsub.f32 %v79, %v120
    %v122 = vand.u32 %v121, 4294901760
    %v123 = vsub.f32 %v121, %v122
    %v124 = vand.u32 %v123, 4294901760
    %125 = vmatmul.f32.gmra.mxu0 %v124
    %v126 = vpop.f32.mrf.mxu0
    %v127 = vadd.f32 %v64, %v126
    %v128 = vand.u32 %v82, 4294901760
    %v129 = vsub.f32 %v82, %v128
    %v130 = vand.u32 %v129, 4294901760
    %v131 = vsub.f32 %v129, %v130
    %v132 = vand.u32 %v131, 4294901760
    %133 = vmatmul.f32.gmra.mxu0 %v132
    %v134 = vpop.f32.mrf.mxu0
    %v135 = vadd.f32 %v69, %v134
    %136 = vdwg.mxu0
    %137 = vmatpush.msra.mxu0 0.0
    %138 = vmatpush.msra.mxu0 0.0
    %139 = vmatpush.msra.mxu0 0.0
    %140 = vmatpush.msra.mxu0 0.0
    %141 = vmatpush.msra.mxu0 0.0
    %142 = vmatpush.msra.mxu0 0.0
    %143 = vmatpush.msra.mxu0 0.0
    %144 = vmatpush.msra.mxu0 0.0
    %145 = vmatpush.msra.mxu0 0.0
    %146 = vmatpush.msra.mxu0 0.0
    %147 = vmatpush.msra.mxu0 0.0
    %148 = vmatpush.msra.mxu0 0.0
    %v149 = vand.u32 %v50, 4294901760
    %v150 = vsub.f32 %v50, %v149
    %v151 = vand.u32 %v150, 4294901760
    %v152 = vsub.f32 %v150, %v151
    %v153 = vand.u32 %v152, 4294901760
    %154 = vmatpush.msra.mxu0 %v153
    %v155 = vand.u32 %v49, 4294901760
    %v156 = vsub.f32 %v49, %v155
    %v157 = vand.u32 %v156, 4294901760
    %v158 = vsub.f32 %v156, %v157
    %v159 = vand.u32 %v158, 4294901760
    %160 = vmatpush.msra.mxu0 %v159
    %v161 = vand.u32 %v48, 4294901760
    %v162 = vsub.f32 %v48, %v161
    %v163 = vand.u32 %v162, 4294901760
    %v164 = vsub.f32 %v162, %v163
    %v165 = vand.u32 %v164, 4294901760
    %166 = vmatpush.msra.mxu0 %v165
    %v167 = vand.u32 %v47, 4294901760
    %v168 = vsub.f32 %v47, %v167
    %v169 = vand.u32 %v168, 4294901760
    %v170 = vsub.f32 %v168, %v169
    %v171 = vand.u32 %v170, 4294901760
    %172 = vmatpush.msra.mxu0 %v171
    %v173 = vand.u32 %v73, 4294901760
    %174 = vmatmul.f32.gmra.mxu0 %v173
    %v175 = vpop.f32.mrf.mxu0
    %v176 = vadd.f32 %v111, %v175
    %v177 = vand.u32 %v76, 4294901760
    %178 = vmatmul.f32.gmra.mxu0 %v177
    %v179 = vpop.f32.mrf.mxu0
    %v180 = vadd.f32 %v119, %v179
    %v181 = vand.u32 %v79, 4294901760
    %182 = vmatmul.f32.gmra.mxu0 %v181
    %v183 = vpop.f32.mrf.mxu0
    %v184 = vadd.f32 %v127, %v183
    %v185 = vand.u32 %v82, 4294901760
    %186 = vmatmul.f32.gmra.mxu0 %v185
    %v187 = vpop.f32.mrf.mxu0
    %v188 = vadd.f32 %v135, %v187
    %189 = vdwg.mxu0
    %190 = vmatpush.msra.mxu0 0.0
    %191 = vmatpush.msra.mxu0 0.0
    %192 = vmatpush.msra.mxu0 0.0
    %193 = vmatpush.msra.mxu0 0.0
    %194 = vmatpush.msra.mxu0 0.0
    %195 = vmatpush.msra.mxu0 0.0
    %196 = vmatpush.msra.mxu0 0.0
    %197 = vmatpush.msra.mxu0 0.0
    %198 = vmatpush.msra.mxu0 0.0
    %199 = vmatpush.msra.mxu0 0.0
    %200 = vmatpush.msra.mxu0 0.0
    %201 = vmatpush.msra.mxu0 0.0
    %v202 = vand.u32 %v50, 4294901760
    %v203 = vsub.f32 %v50, %v202
    %204 = vmatpush.msra.mxu0 %v203
    %v205 = vand.u32 %v49, 4294901760
    %v206 = vsub.f32 %v49, %v205
    %207 = vmatpush.msra.mxu0 %v206
    %v208 = vand.u32 %v48, 4294901760
    %v209 = vsub.f32 %v48, %v208
    %210 = vmatpush.msra.mxu0 %v209
    %v211 = vand.u32 %v47, 4294901760
    %v212 = vsub.f32 %v47, %v211
    %213 = vmatpush.msra.mxu0 %v212
    %v214 = vand.u32 %v73, 4294901760
    %v215 = vsub.f32 %v73, %v214
    %216 = vmatmul.f32.gmra.mxu0 %v215
    %v217 = vpop.f32.mrf.mxu0
    %v218 = vadd.f32 %v176, %v217
    %v219 = vand.u32 %v76, 4294901760
    %v220 = vsub.f32 %v76, %v219
    %221 = vmatmul.f32.gmra.mxu0 %v220
    %v222 = vpop.f32.mrf.mxu0
    %v223 = vadd.f32 %v180, %v222
    %v224 = vand.u32 %v79, 4294901760
    %v225 = vsub.f32 %v79, %v224
    %226 = vmatmul.f32.gmra.mxu0 %v225
    %v227 = vpop.f32.mrf.mxu0
    %v228 = vadd.f32 %v184, %v227
    %v229 = vand.u32 %v82, 4294901760
    %v230 = vsub.f32 %v82, %v229
    %231 = vmatmul.f32.gmra.mxu0 %v230
    %v232 = vpop.f32.mrf.mxu0
    %v233 = vadd.f32 %v188, %v232
    %234 = vdwg.mxu0
    %235 = vmatpush.msra.mxu0 0.0
    %236 = vmatpush.msra.mxu0 0.0
    %237 = vmatpush.msra.mxu0 0.0
    %238 = vmatpush.msra.mxu0 0.0
    %239 = vmatpush.msra.mxu0 0.0
    %240 = vmatpush.msra.mxu0 0.0
    %241 = vmatpush.msra.mxu0 0.0
    %242 = vmatpush.msra.mxu0 0.0
    %243 = vmatpush.msra.mxu0 0.0
    %244 = vmatpush.msra.mxu0 0.0
    %245 = vmatpush.msra.mxu0 0.0
    %246 = vmatpush.msra.mxu0 0.0
    %v247 = vand.u32 %v50, 4294901760
    %248 = vmatpush.msra.mxu0 %v247
    %v249 = vand.u32 %v49, 4294901760
    %250 = vmatpush.msra.mxu0 %v249
    %v251 = vand.u32 %v48, 4294901760
    %252 = vmatpush.msra.mxu0 %v251
    %v253 = vand.u32 %v47, 4294901760
    %254 = vmatpush.msra.mxu0 %v253
    %v255 = vand.u32 %v73, 4294901760
    %v256 = vsub.f32 %v73, %v255
    %v257 = vand.u32 %v256, 4294901760
    %258 = vmatmul.f32.gmra.mxu0 %v257
    %v259 = vpop.f32.mrf.mxu0
    %v260 = vadd.f32 %v218, %v259
    %v261 = vand.u32 %v76, 4294901760
    %v262 = vsub.f32 %v76, %v261
    %v263 = vand.u32 %v262, 4294901760
    %264 = vmatmul.f32.gmra.mxu0 %v263
    %v265 = vpop.f32.mrf.mxu0
    %v266 = vadd.f32 %v223, %v265
    %v267 = vand.u32 %v79, 4294901760
    %v268 = vsub.f32 %v79, %v267
    %v269 = vand.u32 %v268, 4294901760
    %270 = vmatmul.f32.gmra.mxu0 %v269
    %v271 = vpop.f32.mrf.mxu0
    %v272 = vadd.f32 %v228, %v271
    %v273 = vand.u32 %v82, 4294901760
    %v274 = vsub.f32 %v82, %v273
    %v275 = vand.u32 %v274, 4294901760
    %276 = vmatmul.f32.gmra.mxu0 %v275
    %v277 = vpop.f32.mrf.mxu0
    %v278 = vadd.f32 %v233, %v277
    %279 = vdwg.mxu0
    %280 = vmatpush.msra.mxu0 0.0
    %281 = vmatpush.msra.mxu0 0.0
    %282 = vmatpush.msra.mxu0 0.0
    %283 = vmatpush.msra.mxu0 0.0
    %284 = vmatpush.msra.mxu0 0.0
    %285 = vmatpush.msra.mxu0 0.0
    %286 = vmatpush.msra.mxu0 0.0
    %287 = vmatpush.msra.mxu0 0.0
    %288 = vmatpush.msra.mxu0 0.0
    %289 = vmatpush.msra.mxu0 0.0
    %290 = vmatpush.msra.mxu0 0.0
    %291 = vmatpush.msra.mxu0 0.0
    %v292 = vand.u32 %v50, 4294901760
    %v293 = vsub.f32 %v50, %v292
    %v294 = vand.u32 %v293, 4294901760
    %295 = vmatpush.msra.mxu0 %v294
    %v296 = vand.u32 %v49, 4294901760
    %v297 = vsub.f32 %v49, %v296
    %v298 = vand.u32 %v297, 4294901760
    %299 = vmatpush.msra.mxu0 %v298
    %v300 = vand.u32 %v48, 4294901760
    %v301 = vsub.f32 %v48, %v300
    %v302 = vand.u32 %v301, 4294901760
    %303 = vmatpush.msra.mxu0 %v302
    %v304 = vand.u32 %v47, 4294901760
    %v305 = vsub.f32 %v47, %v304
    %v306 = vand.u32 %v305, 4294901760
    %307 = vmatpush.msra.mxu0 %v306
    %v308 = vand.u32 %v73, 4294901760
    %309 = vmatmul.f32.gmra.mxu0 %v308
    %v310 = vpop.f32.mrf.mxu0
    %v311 = vadd.f32 %v260, %v310
    %v312 = vand.u32 %v76, 4294901760
    %313 = vmatmul.f32.gmra.mxu0 %v312
    %v314 = vpop.f32.mrf.mxu0
    %v315 = vadd.f32 %v266, %v314
    %v316 = vand.u32 %v79, 4294901760
    %317 = vmatmul.f32.gmra.mxu0 %v316
    %v318 = vpop.f32.mrf.mxu0
    %v319 = vadd.f32 %v272, %v318
    %v320 = vand.u32 %v82, 4294901760
    %321 = vmatmul.f32.gmra.mxu0 %v320
    %v322 = vpop.f32.mrf.mxu0
    %v323 = vadd.f32 %v278, %v322
    %324 = vdwg.mxu0
    %325 = vmatpush.msra.mxu0 0.0
    %326 = vmatpush.msra.mxu0 0.0
    %327 = vmatpush.msra.mxu0 0.0
    %328 = vmatpush.msra.mxu0 0.0
    %329 = vmatpush.msra.mxu0 0.0
    %330 = vmatpush.msra.mxu0 0.0
    %331 = vmatpush.msra.mxu0 0.0
    %332 = vmatpush.msra.mxu0 0.0
    %333 = vmatpush.msra.mxu0 0.0
    %334 = vmatpush.msra.mxu0 0.0
    %335 = vmatpush.msra.mxu0 0.0
    %336 = vmatpush.msra.mxu0 0.0
    %v337 = vand.u32 %v50, 4294901760
    %338 = vmatpush.msra.mxu0 %v337
    %v339 = vand.u32 %v49, 4294901760
    %340 = vmatpush.msra.mxu0 %v339
    %v341 = vand.u32 %v48, 4294901760
    %342 = vmatpush.msra.mxu0 %v341
    %v343 = vand.u32 %v47, 4294901760
    %344 = vmatpush.msra.mxu0 %v343
    %v345 = vand.u32 %v73, 4294901760
    %346 = vmatmul.f32.gmra.mxu0 %v345
    %v347 = vpop.f32.mrf.mxu0
    %v348 = vadd.f32 %v311, %v347
    %v349 = vand.u32 %v76, 4294901760
    %350 = vmatmul.f32.gmra.mxu0 %v349
    %v351 = vpop.f32.mrf.mxu0
    %v352 = vadd.f32 %v315, %v351
    %v353 = vand.u32 %v79, 4294901760
    %354 = vmatmul.f32.gmra.mxu0 %v353
    %v355 = vpop.f32.mrf.mxu0
    %v356 = vadd.f32 %v319, %v355
    %v357 = vand.u32 %v82, 4294901760
    %358 = vmatmul.f32.gmra.mxu0 %v357
    %v359 = vpop.f32.mrf.mxu0
    %v360 = vadd.f32 %v323, %v359
    %361 = vdwg.mxu0
    %v362 = vmax.f32 %v348, 0.0
    %v363 = vmax.f32 %v352, 0.0
    %v364 = vmax.f32 %v356, 0.0
    %v365 = vmax.f32 %v360, 0.0
    %367 = vset.pattern.permute.xlu0 0
    %368 = vperm.xlu0 %367, %v35
    %v369 = vpop.permute.xlu0 %368
    %372 = vset.pattern.permute.xlu0 0
    %373 = vperm.xlu0 %372, %v36
    %v374 = vpop.permute.xlu0 %373
    %377 = vset.pattern.permute.xlu0 0
    %378 = vperm.xlu0 %377, %v37
    %v379 = vpop.permute.xlu0 %378
    %382 = vset.pattern.permute.xlu0 0
    %383 = vperm.xlu0 %382, %v38
    %v384 = vpop.permute.xlu0 %383
    %v387 = vsel %vm71, %v19, 0
    %v390 = vsel %vm71, %v20, 0
    %v393 = vsel %vm71, %v21, 0
    %v396 = vsel %vm71, %v22, 0
    %398 = vmatpush.msra.mxu0 0.0
    %399 = vmatpush.msra.mxu0 0.0
    %400 = vmatpush.msra.mxu0 0.0
    %401 = vmatpush.msra.mxu0 0.0
    %402 = vmatpush.msra.mxu0 0.0
    %403 = vmatpush.msra.mxu0 0.0
    %404 = vmatpush.msra.mxu0 0.0
    %405 = vmatpush.msra.mxu0 0.0
    %406 = vmatpush.msra.mxu0 0.0
    %407 = vmatpush.msra.mxu0 0.0
    %408 = vmatpush.msra.mxu0 0.0
    %409 = vmatpush.msra.mxu0 0.0
    %v410 = vand.u32 %v365, 4294901760
    %411 = vmatpush.msra.mxu0 %v410
    %v412 = vand.u32 %v364, 4294901760
    %413 = vmatpush.msra.mxu0 %v412
    %v414 = vand.u32 %v363, 4294901760
    %415 = vmatpush.msra.mxu0 %v414
    %v416 = vand.u32 %v362, 4294901760
    %417 = vmatpush.msra.mxu0 %v416
    %v418 = vand.u32 %v387, 4294901760
    %v419 = vsub.f32 %v387, %v418
    %v420 = vand.u32 %v419, 4294901760
    %v421 = vsub.f32 %v419, %v420
    %v422 = vand.u32 %v421, 4294901760
    %423 = vmatmul.f32.gmra.mxu0 %v422
    %v424 = vpop.f32.mrf.mxu0
    %v425 = vadd.f32 %v369, %v424
    %v426 = vand.u32 %v390, 4294901760
    %v427 = vsub.f32 %v390, %v426
    %v428 = vand.u32 %v427, 4294901760
    %v429 = vsub.f32 %v427, %v428
    %v430 = vand.u32 %v429, 4294901760
    %431 = vmatmul.f32.gmra.mxu0 %v430
    %v432 = vpop.f32.mrf.mxu0
    %v433 = vadd.f32 %v374, %v432
    %v434 = vand.u32 %v393, 4294901760
    %v435 = vsub.f32 %v393, %v434
    %v436 = vand.u32 %v435, 4294901760
    %v437 = vsub.f32 %v435, %v436
    %v438 = vand.u32 %v437, 4294901760
    %439 = vmatmul.f32.gmra.mxu0 %v438
    %v440 = vpop.f32.mrf.mxu0
    %v441 = vadd.f32 %v379, %v440
    %v442 = vand.u32 %v396, 4294901760
    %v443 = vsub.f32 %v396, %v442
    %v444 = vand.u32 %v443, 4294901760
    %v445 = vsub.f32 %v443, %v444
    %v446 = vand.u32 %v445, 4294901760
    %447 = vmatmul.f32.gmra.mxu0 %v446
    %v448 = vpop.f32.mrf.mxu0
    %v449 = vadd.f32 %v384, %v448
    %450 = vdwg.mxu0
    %451 = vmatpush.msra.mxu0 0.0
    %452 = vmatpush.msra.mxu0 0.0
    %453 = vmatpush.msra.mxu0 0.0
    %454 = vmatpush.msra.mxu0 0.0
    %455 = vmatpush.msra.mxu0 0.0
    %456 = vmatpush.msra.mxu0 0.0
    %457 = vmatpush.msra.mxu0 0.0
    %458 = vmatpush.msra.mxu0 0.0
    %459 = vmatpush.msra.mxu0 0.0
    %460 = vmatpush.msra.mxu0 0.0
    %461 = vmatpush.msra.mxu0 0.0
    %462 = vmatpush.msra.mxu0 0.0
    %v463 = vand.u32 %v365, 4294901760
    %v464 = vsub.f32 %v365, %v463
    %v465 = vand.u32 %v464, 4294901760
    %v466 = vsub.f32 %v464, %v465
    %v467 = vand.u32 %v466, 4294901760
    %468 = vmatpush.msra.mxu0 %v467
    %v469 = vand.u32 %v364, 4294901760
    %v470 = vsub.f32 %v364, %v469
    %v471 = vand.u32 %v470, 4294901760
    %v472 = vsub.f32 %v470, %v471
    %v473 = vand.u32 %v472, 4294901760
    %474 = vmatpush.msra.mxu0 %v473
    %v475 = vand.u32 %v363, 4294901760
    %v476 = vsub.f32 %v363, %v475
    %v477 = vand.u32 %v476, 4294901760
    %v478 = vsub.f32 %v476, %v477
    %v479 = vand.u32 %v478, 4294901760
    %480 = vmatpush.msra.mxu0 %v479
    %v481 = vand.u32 %v362, 4294901760
    %v482 = vsub.f32 %v362, %v481
    %v483 = vand.u32 %v482, 4294901760
    %v484 = vsub.f32 %v482, %v483
    %v485 = vand.u32 %v484, 4294901760
    %486 = vmatpush.msra.mxu0 %v485
    %v487 = vand.u32 %v387, 4294901760
    %488 = vmatmul.f32.gmra.mxu0 %v487
    %v489 = vpop.f32.mrf.mxu0
    %v490 = vadd.f32 %v425, %v489
    %v491 = vand.u32 %v390, 4294901760
    %492 = vmatmul.f32.gmra.mxu0 %v491
    %v493 = vpop.f32.mrf.mxu0
    %v494 = vadd.f32 %v433, %v493
    %v495 = vand.u32 %v393, 4294901760
    %496 = vmatmul.f32.gmra.mxu0 %v495
    %v497 = vpop.f32.mrf.mxu0
    %v498 = vadd.f32 %v441, %v497
    %v499 = vand.u32 %v396, 4294901760
    %500 = vmatmul.f32.gmra.mxu0 %v499
    %v501 = vpop.f32.mrf.mxu0
    %v502 = vadd.f32 %v449, %v501
    %503 = vdwg.mxu0
    %504 = vmatpush.msra.mxu0 0.0
    %505 = vmatpush.msra.mxu0 0.0
    %506 = vmatpush.msra.mxu0 0.0
    %507 = vmatpush.msra.mxu0 0.0
    %508 = vmatpush.msra.mxu0 0.0
    %509 = vmatpush.msra.mxu0 0.0
    %510 = vmatpush.msra.mxu0 0.0
    %511 = vmatpush.msra.mxu0 0.0
    %512 = vmatpush.msra.mxu0 0.0
    %513 = vmatpush.msra.mxu0 0.0
    %514 = vmatpush.msra.mxu0 0.0
    %515 = vmatpush.msra.mxu0 0.0
    %v516 = vand.u32 %v365, 4294901760
    %v517 = vsub.f32 %v365, %v516
    %518 = vmatpush.msra.mxu0 %v517
    %v519 = vand.u32 %v364, 4294901760
    %v520 = vsub.f32 %v364, %v519
    %521 = vmatpush.msra.mxu0 %v520
    %v522 = vand.u32 %v363, 4294901760
    %v523 = vsub.f32 %v363, %v522
    %524 = vmatpush.msra.mxu0 %v523
    %v525 = vand.u32 %v362, 4294901760
    %v526 = vsub.f32 %v362, %v525
    %527 = vmatpush.msra.mxu0 %v526
    %v528 = vand.u32 %v387, 4294901760
    %v529 = vsub.f32 %v387, %v528
    %530 = vmatmul.f32.gmra.mxu0 %v529
    %v531 = vpop.f32.mrf.mxu0
    %v532 = vadd.f32 %v490, %v531
    %v533 = vand.u32 %v390, 4294901760
    %v534 = vsub.f32 %v390, %v533
    %535 = vmatmul.f32.gmra.mxu0 %v534
    %v536 = vpop.f32.mrf.mxu0
    %v537 = vadd.f32 %v494, %v536
    %v538 = vand.u32 %v393, 4294901760
    %v539 = vsub.f32 %v393, %v538
    %540 = vmatmul.f32.gmra.mxu0 %v539
    %v541 = vpop.f32.mrf.mxu0
    %v542 = vadd.f32 %v498, %v541
    %v543 = vand.u32 %v396, 4294901760
    %v544 = vsub.f32 %v396, %v543
    %545 = vmatmul.f32.gmra.mxu0 %v544
    %v546 = vpop.f32.mrf.mxu0
    %v547 = vadd.f32 %v502, %v546
    %548 = vdwg.mxu0
    %549 = vmatpush.msra.mxu0 0.0
    %550 = vmatpush.msra.mxu0 0.0
    %551 = vmatpush.msra.mxu0 0.0
    %552 = vmatpush.msra.mxu0 0.0
    %553 = vmatpush.msra.mxu0 0.0
    %554 = vmatpush.msra.mxu0 0.0
    %555 = vmatpush.msra.mxu0 0.0
    %556 = vmatpush.msra.mxu0 0.0
    %557 = vmatpush.msra.mxu0 0.0
    %558 = vmatpush.msra.mxu0 0.0
    %559 = vmatpush.msra.mxu0 0.0
    %560 = vmatpush.msra.mxu0 0.0
    %v561 = vand.u32 %v365, 4294901760
    %562 = vmatpush.msra.mxu0 %v561
    %v563 = vand.u32 %v364, 4294901760
    %564 = vmatpush.msra.mxu0 %v563
    %v565 = vand.u32 %v363, 4294901760
    %566 = vmatpush.msra.mxu0 %v565
    %v567 = vand.u32 %v362, 4294901760
    %568 = vmatpush.msra.mxu0 %v567
    %v569 = vand.u32 %v387, 4294901760
    %v570 = vsub.f32 %v387, %v569
    %v571 = vand.u32 %v570, 4294901760
    %572 = vmatmul.f32.gmra.mxu0 %v571
    %v573 = vpop.f32.mrf.mxu0
    %v574 = vadd.f32 %v532, %v573
    %v575 = vand.u32 %v390, 4294901760
    %v576 = vsub.f32 %v390, %v575
    %v577 = vand.u32 %v576, 4294901760
    %578 = vmatmul.f32.gmra.mxu0 %v577
    %v579 = vpop.f32.mrf.mxu0
    %v580 = vadd.f32 %v537, %v579
    %v581 = vand.u32 %v393, 4294901760
    %v582 = vsub.f32 %v393, %v581
    %v583 = vand.u32 %v582, 4294901760
    %584 = vmatmul.f32.gmra.mxu0 %v583
    %v585 = vpop.f32.mrf.mxu0
    %v586 = vadd.f32 %v542, %v585
    %v587 = vand.u32 %v396, 4294901760
    %v588 = vsub.f32 %v396, %v587
    %v589 = vand.u32 %v588, 4294901760
    %590 = vmatmul.f32.gmra.mxu0 %v589
    %v591 = vpop.f32.mrf.mxu0
    %v592 = vadd.f32 %v547, %v591
    %593 = vdwg.mxu0
    %594 = vmatpush.msra.mxu0 0.0
    %595 = vmatpush.msra.mxu0 0.0
    %596 = vmatpush.msra.mxu0 0.0
    %597 = vmatpush.msra.mxu0 0.0
    %598 = vmatpush.msra.mxu0 0.0
    %599 = vmatpush.msra.mxu0 0.0
    %600 = vmatpush.msra.mxu0 0.0
    %601 = vmatpush.msra.mxu0 0.0
    %602 = vmatpush.msra.mxu0 0.0
    %603 = vmatpush.msra.mxu0 0.0
    %604 = vmatpush.msra.mxu0 0.0
    %605 = vmatpush.msra.mxu0 0.0
    %v606 = vand.u32 %v365, 4294901760
    %v607 = vsub.f32 %v365, %v606
    %v608 = vand.u32 %v607, 4294901760
    %609 = vmatpush.msra.mxu0 %v608
    %v610 = vand.u32 %v364, 4294901760
    %v611 = vsub.f32 %v364, %v610
    %v612 = vand.u32 %v611, 4294901760
    %613 = vmatpush.msra.mxu0 %v612
    %v614 = vand.u32 %v363, 4294901760
    %v615 = vsub.f32 %v363, %v614
    %v616 = vand.u32 %v615, 4294901760
    %617 = vmatpush.msra.mxu0 %v616
    %v618 = vand.u32 %v362, 4294901760
    %v619 = vsub.f32 %v362, %v618
    %v620 = vand.u32 %v619, 4294901760
    %621 = vmatpush.msra.mxu0 %v620
    %v622 = vand.u32 %v387, 4294901760
    %623 = vmatmul.f32.gmra.mxu0 %v622
    %v624 = vpop.f32.mrf.mxu0
    %v625 = vadd.f32 %v574, %v624
    %v626 = vand.u32 %v390, 4294901760
    %627 = vmatmul.f32.gmra.mxu0 %v626
    %v628 = vpop.f32.mrf.mxu0
    %v629 = vadd.f32 %v580, %v628
    %v630 = vand.u32 %v393, 4294901760
    %631 = vmatmul.f32.gmra.mxu0 %v630
    %v632 = vpop.f32.mrf.mxu0
    %v633 = vadd.f32 %v586, %v632
    %v634 = vand.u32 %v396, 4294901760
    %635 = vmatmul.f32.gmra.mxu0 %v634
    %v636 = vpop.f32.mrf.mxu0
    %v637 = vadd.f32 %v592, %v636
    %638 = vdwg.mxu0
    %639 = vmatpush.msra.mxu0 0.0
    %640 = vmatpush.msra.mxu0 0.0
    %641 = vmatpush.msra.mxu0 0.0
    %642 = vmatpush.msra.mxu0 0.0
    %643 = vmatpush.msra.mxu0 0.0
    %644 = vmatpush.msra.mxu0 0.0
    %645 = vmatpush.msra.mxu0 0.0
    %646 = vmatpush.msra.mxu0 0.0
    %647 = vmatpush.msra.mxu0 0.0
    %648 = vmatpush.msra.mxu0 0.0
    %649 = vmatpush.msra.mxu0 0.0
    %650 = vmatpush.msra.mxu0 0.0
    %v651 = vand.u32 %v365, 4294901760
    %652 = vmatpush.msra.mxu0 %v651
    %v653 = vand.u32 %v364, 4294901760
    %654 = vmatpush.msra.mxu0 %v653
    %v655 = vand.u32 %v363, 4294901760
    %656 = vmatpush.msra.mxu0 %v655
    %v657 = vand.u32 %v362, 4294901760
    %658 = vmatpush.msra.mxu0 %v657
    %v659 = vand.u32 %v387, 4294901760
    %660 = vmatmul.f32.gmra.mxu0 %v659
    %v661 = vpop.f32.mrf.mxu0
    %v662 = vadd.f32 %v625, %v661
    %v663 = vand.u32 %v390, 4294901760
    %664 = vmatmul.f32.gmra.mxu0 %v663
    %v665 = vpop.f32.mrf.mxu0
    %v666 = vadd.f32 %v629, %v665
    %v667 = vand.u32 %v393, 4294901760
    %668 = vmatmul.f32.gmra.mxu0 %v667
    %v669 = vpop.f32.mrf.mxu0
    %v670 = vadd.f32 %v633, %v669
    %v671 = vand.u32 %v396, 4294901760
    %672 = vmatmul.f32.gmra.mxu0 %v671
    %v673 = vpop.f32.mrf.mxu0
    %v674 = vadd.f32 %v637, %v673
    %675 = vdwg.mxu0
    %677 = vset.pattern.permute.xlu0 0
    %678 = vperm.xlu0 %677, %v39
    %v679 = vpop.permute.xlu0 %678
    %682 = vset.pattern.permute.xlu0 0
    %683 = vperm.xlu0 %682, %v40
    %v684 = vpop.permute.xlu0 %683
    %687 = vset.pattern.permute.xlu0 0
    %688 = vperm.xlu0 %687, %v41
    %v689 = vpop.permute.xlu0 %688
    %692 = vset.pattern.permute.xlu0 0
    %693 = vperm.xlu0 %692, %v42
    %v694 = vpop.permute.xlu0 %693
    %v697 = vsel %vm71, %v23, 0
    %v700 = vsel %vm71, %v24, 0
    %v703 = vsel %vm71, %v25, 0
    %v706 = vsel %vm71, %v26, 0
    %708 = vmatpush.msra.mxu0 0.0
    %709 = vmatpush.msra.mxu0 0.0
    %710 = vmatpush.msra.mxu0 0.0
    %711 = vmatpush.msra.mxu0 0.0
    %712 = vmatpush.msra.mxu0 0.0
    %713 = vmatpush.msra.mxu0 0.0
    %714 = vmatpush.msra.mxu0 0.0
    %715 = vmatpush.msra.mxu0 0.0
    %716 = vmatpush.msra.mxu0 0.0
    %717 = vmatpush.msra.mxu0 0.0
    %718 = vmatpush.msra.mxu0 0.0
    %719 = vmatpush.msra.mxu0 0.0
    %v720 = vand.u32 %v674, 4294901760
    %721 = vmatpush.msra.mxu0 %v720
    %v722 = vand.u32 %v670, 4294901760
    %723 = vmatpush.msra.mxu0 %v722
    %v724 = vand.u32 %v666, 4294901760
    %725 = vmatpush.msra.mxu0 %v724
    %v726 = vand.u32 %v662, 4294901760
    %727 = vmatpush.msra.mxu0 %v726
    %v728 = vand.u32 %v697, 4294901760
    %v729 = vsub.f32 %v697, %v728
    %v730 = vand.u32 %v729, 4294901760
    %v731 = vsub.f32 %v729, %v730
    %v732 = vand.u32 %v731, 4294901760
    %733 = vmatmul.f32.gmra.mxu0 %v732
    %v734 = vpop.f32.mrf.mxu0
    %v735 = vadd.f32 %v679, %v734
    %v736 = vand.u32 %v700, 4294901760
    %v737 = vsub.f32 %v700, %v736
    %v738 = vand.u32 %v737, 4294901760
    %v739 = vsub.f32 %v737, %v738
    %v740 = vand.u32 %v739, 4294901760
    %741 = vmatmul.f32.gmra.mxu0 %v740
    %v742 = vpop.f32.mrf.mxu0
    %v743 = vadd.f32 %v684, %v742
    %v744 = vand.u32 %v703, 4294901760
    %v745 = vsub.f32 %v703, %v744
    %v746 = vand.u32 %v745, 4294901760
    %v747 = vsub.f32 %v745, %v746
    %v748 = vand.u32 %v747, 4294901760
    %749 = vmatmul.f32.gmra.mxu0 %v748
    %v750 = vpop.f32.mrf.mxu0
    %v751 = vadd.f32 %v689, %v750
    %v752 = vand.u32 %v706, 4294901760
    %v753 = vsub.f32 %v706, %v752
    %v754 = vand.u32 %v753, 4294901760
    %v755 = vsub.f32 %v753, %v754
    %v756 = vand.u32 %v755, 4294901760
    %757 = vmatmul.f32.gmra.mxu0 %v756
    %v758 = vpop.f32.mrf.mxu0
    %v759 = vadd.f32 %v694, %v758
    %760 = vdwg.mxu0
    %761 = vmatpush.msra.mxu0 0.0
    %762 = vmatpush.msra.mxu0 0.0
    %763 = vmatpush.msra.mxu0 0.0
    %764 = vmatpush.msra.mxu0 0.0
    %765 = vmatpush.msra.mxu0 0.0
    %766 = vmatpush.msra.mxu0 0.0
    %767 = vmatpush.msra.mxu0 0.0
    %768 = vmatpush.msra.mxu0 0.0
    %769 = vmatpush.msra.mxu0 0.0
    %770 = vmatpush.msra.mxu0 0.0
    %771 = vmatpush.msra.mxu0 0.0
    %772 = vmatpush.msra.mxu0 0.0
    %v773 = vand.u32 %v674, 4294901760
    %v774 = vsub.f32 %v674, %v773
    %v775 = vand.u32 %v774, 4294901760
    %v776 = vsub.f32 %v774, %v775
    %v777 = vand.u32 %v776, 4294901760
    %778 = vmatpush.msra.mxu0 %v777
    %v779 = vand.u32 %v670, 4294901760
    %v780 = vsub.f32 %v670, %v779
    %v781 = vand.u32 %v780, 4294901760
    %v782 = vsub.f32 %v780, %v781
    %v783 = vand.u32 %v782, 4294901760
    %784 = vmatpush.msra.mxu0 %v783
    %v785 = vand.u32 %v666, 4294901760
    %v786 = vsub.f32 %v666, %v785
    %v787 = vand.u32 %v786, 4294901760
    %v788 = vsub.f32 %v786, %v787
    %v789 = vand.u32 %v788, 4294901760
    %790 = vmatpush.msra.mxu0 %v789
    %v791 = vand.u32 %v662, 4294901760
    %v792 = vsub.f32 %v662, %v791
    %v793 = vand.u32 %v792, 4294901760
    %v794 = vsub.f32 %v792, %v793
    %v795 = vand.u32 %v794, 4294901760
    %796 = vmatpush.msra.mxu0 %v795
    %v797 = vand.u32 %v697, 4294901760
    %798 = vmatmul.f32.gmra.mxu0 %v797
    %v799 = vpop.f32.mrf.mxu0
    %v800 = vadd.f32 %v735, %v799
    %v801 = vand.u32 %v700, 4294901760
    %802 = vmatmul.f32.gmra.mxu0 %v801
    %v803 = vpop.f32.mrf.mxu0
    %v804 = vadd.f32 %v743, %v803
    %v805 = vand.u32 %v703, 4294901760
    %806 = vmatmul.f32.gmra.mxu0 %v805
    %v807 = vpop.f32.mrf.mxu0
    %v808 = vadd.f32 %v751, %v807
    %v809 = vand.u32 %v706, 4294901760
    %810 = vmatmul.f32.gmra.mxu0 %v809
    %v811 = vpop.f32.mrf.mxu0
    %v812 = vadd.f32 %v759, %v811
    %813 = vdwg.mxu0
    %814 = vmatpush.msra.mxu0 0.0
    %815 = vmatpush.msra.mxu0 0.0
    %816 = vmatpush.msra.mxu0 0.0
    %817 = vmatpush.msra.mxu0 0.0
    %818 = vmatpush.msra.mxu0 0.0
    %819 = vmatpush.msra.mxu0 0.0
    %820 = vmatpush.msra.mxu0 0.0
    %821 = vmatpush.msra.mxu0 0.0
    %822 = vmatpush.msra.mxu0 0.0
    %823 = vmatpush.msra.mxu0 0.0
    %824 = vmatpush.msra.mxu0 0.0
    %825 = vmatpush.msra.mxu0 0.0
    %v826 = vand.u32 %v674, 4294901760
    %v827 = vsub.f32 %v674, %v826
    %828 = vmatpush.msra.mxu0 %v827
    %v829 = vand.u32 %v670, 4294901760
    %v830 = vsub.f32 %v670, %v829
    %831 = vmatpush.msra.mxu0 %v830
    %v832 = vand.u32 %v666, 4294901760
    %v833 = vsub.f32 %v666, %v832
    %834 = vmatpush.msra.mxu0 %v833
    %v835 = vand.u32 %v662, 4294901760
    %v836 = vsub.f32 %v662, %v835
    %837 = vmatpush.msra.mxu0 %v836
    %v838 = vand.u32 %v697, 4294901760
    %v839 = vsub.f32 %v697, %v838
    %840 = vmatmul.f32.gmra.mxu0 %v839
    %v841 = vpop.f32.mrf.mxu0
    %v842 = vadd.f32 %v800, %v841
    %v843 = vand.u32 %v700, 4294901760
    %v844 = vsub.f32 %v700, %v843
    %845 = vmatmul.f32.gmra.mxu0 %v844
    %v846 = vpop.f32.mrf.mxu0
    %v847 = vadd.f32 %v804, %v846
    %v848 = vand.u32 %v703, 4294901760
    %v849 = vsub.f32 %v703, %v848
    %850 = vmatmul.f32.gmra.mxu0 %v849
    %v851 = vpop.f32.mrf.mxu0
    %v852 = vadd.f32 %v808, %v851
    %v853 = vand.u32 %v706, 4294901760
    %v854 = vsub.f32 %v706, %v853
    %855 = vmatmul.f32.gmra.mxu0 %v854
    %v856 = vpop.f32.mrf.mxu0
    %v857 = vadd.f32 %v812, %v856
    %858 = vdwg.mxu0
    %859 = vmatpush.msra.mxu0 0.0
    %860 = vmatpush.msra.mxu0 0.0
    %861 = vmatpush.msra.mxu0 0.0
    %862 = vmatpush.msra.mxu0 0.0
    %863 = vmatpush.msra.mxu0 0.0
    %864 = vmatpush.msra.mxu0 0.0
    %865 = vmatpush.msra.mxu0 0.0
    %866 = vmatpush.msra.mxu0 0.0
    %867 = vmatpush.msra.mxu0 0.0
    %868 = vmatpush.msra.mxu0 0.0
    %869 = vmatpush.msra.mxu0 0.0
    %870 = vmatpush.msra.mxu0 0.0
    %v871 = vand.u32 %v674, 4294901760
    %872 = vmatpush.msra.mxu0 %v871
    %v873 = vand.u32 %v670, 4294901760
    %874 = vmatpush.msra.mxu0 %v873
    %v875 = vand.u32 %v666, 4294901760
    %876 = vmatpush.msra.mxu0 %v875
    %v877 = vand.u32 %v662, 4294901760
    %878 = vmatpush.msra.mxu0 %v877
    %v879 = vand.u32 %v697, 4294901760
    %v880 = vsub.f32 %v697, %v879
    %v881 = vand.u32 %v880, 4294901760
    %882 = vmatmul.f32.gmra.mxu0 %v881
    %v883 = vpop.f32.mrf.mxu0
    %v884 = vadd.f32 %v842, %v883
    %v885 = vand.u32 %v700, 4294901760
    %v886 = vsub.f32 %v700, %v885
    %v887 = vand.u32 %v886, 4294901760
    %888 = vmatmul.f32.gmra.mxu0 %v887
    %v889 = vpop.f32.mrf.mxu0
    %v890 = vadd.f32 %v847, %v889
    %v891 = vand.u32 %v703, 4294901760
    %v892 = vsub.f32 %v703, %v891
    %v893 = vand.u32 %v892, 4294901760
    %894 = vmatmul.f32.gmra.mxu0 %v893
    %v895 = vpop.f32.mrf.mxu0
    %v896 = vadd.f32 %v852, %v895
    %v897 = vand.u32 %v706, 4294901760
    %v898 = vsub.f32 %v706, %v897
    %v899 = vand.u32 %v898, 4294901760
    %900 = vmatmul.f32.gmra.mxu0 %v899
    %v901 = vpop.f32.mrf.mxu0
    %v902 = vadd.f32 %v857, %v901
    %903 = vdwg.mxu0
    %904 = vmatpush.msra.mxu0 0.0
    %905 = vmatpush.msra.mxu0 0.0
    %906 = vmatpush.msra.mxu0 0.0
    %907 = vmatpush.msra.mxu0 0.0
    %908 = vmatpush.msra.mxu0 0.0
    %909 = vmatpush.msra.mxu0 0.0
    %910 = vmatpush.msra.mxu0 0.0
    %911 = vmatpush.msra.mxu0 0.0
    %912 = vmatpush.msra.mxu0 0.0
    %913 = vmatpush.msra.mxu0 0.0
    %914 = vmatpush.msra.mxu0 0.0
    %915 = vmatpush.msra.mxu0 0.0
    %v916 = vand.u32 %v674, 4294901760
    %v917 = vsub.f32 %v674, %v916
    %v918 = vand.u32 %v917, 4294901760
    %919 = vmatpush.msra.mxu0 %v918
    %v920 = vand.u32 %v670, 4294901760
    %v921 = vsub.f32 %v670, %v920
    %v922 = vand.u32 %v921, 4294901760
    %923 = vmatpush.msra.mxu0 %v922
    %v924 = vand.u32 %v666, 4294901760
    %v925 = vsub.f32 %v666, %v924
    %v926 = vand.u32 %v925, 4294901760
    %927 = vmatpush.msra.mxu0 %v926
    %v928 = vand.u32 %v662, 4294901760
    %v929 = vsub.f32 %v662, %v928
    %v930 = vand.u32 %v929, 4294901760
    %931 = vmatpush.msra.mxu0 %v930
    %v932 = vand.u32 %v697, 4294901760
    %933 = vmatmul.f32.gmra.mxu0 %v932
    %v934 = vpop.f32.mrf.mxu0
    %v935 = vadd.f32 %v884, %v934
    %v936 = vand.u32 %v700, 4294901760
    %937 = vmatmul.f32.gmra.mxu0 %v936
    %v938 = vpop.f32.mrf.mxu0
    %v939 = vadd.f32 %v890, %v938
    %v940 = vand.u32 %v703, 4294901760
    %941 = vmatmul.f32.gmra.mxu0 %v940
    %v942 = vpop.f32.mrf.mxu0
    %v943 = vadd.f32 %v896, %v942
    %v944 = vand.u32 %v706, 4294901760
    %945 = vmatmul.f32.gmra.mxu0 %v944
    %v946 = vpop.f32.mrf.mxu0
    %v947 = vadd.f32 %v902, %v946
    %948 = vdwg.mxu0
    %949 = vmatpush.msra.mxu0 0.0
    %950 = vmatpush.msra.mxu0 0.0
    %951 = vmatpush.msra.mxu0 0.0
    %952 = vmatpush.msra.mxu0 0.0
    %953 = vmatpush.msra.mxu0 0.0
    %954 = vmatpush.msra.mxu0 0.0
    %955 = vmatpush.msra.mxu0 0.0
    %956 = vmatpush.msra.mxu0 0.0
    %957 = vmatpush.msra.mxu0 0.0
    %958 = vmatpush.msra.mxu0 0.0
    %959 = vmatpush.msra.mxu0 0.0
    %960 = vmatpush.msra.mxu0 0.0
    %v961 = vand.u32 %v674, 4294901760
    %962 = vmatpush.msra.mxu0 %v961
    %v963 = vand.u32 %v670, 4294901760
    %964 = vmatpush.msra.mxu0 %v963
    %v965 = vand.u32 %v666, 4294901760
    %966 = vmatpush.msra.mxu0 %v965
    %v967 = vand.u32 %v662, 4294901760
    %968 = vmatpush.msra.mxu0 %v967
    %v969 = vand.u32 %v697, 4294901760
    %970 = vmatmul.f32.gmra.mxu0 %v969
    %v971 = vpop.f32.mrf.mxu0
    %v972 = vadd.f32 %v935, %v971
    %v973 = vand.u32 %v700, 4294901760
    %974 = vmatmul.f32.gmra.mxu0 %v973
    %v975 = vpop.f32.mrf.mxu0
    %v976 = vadd.f32 %v939, %v975
    %v977 = vand.u32 %v703, 4294901760
    %978 = vmatmul.f32.gmra.mxu0 %v977
    %v979 = vpop.f32.mrf.mxu0
    %v980 = vadd.f32 %v943, %v979
    %v981 = vand.u32 %v706, 4294901760
    %982 = vmatmul.f32.gmra.mxu0 %v981
    %v983 = vpop.f32.mrf.mxu0
    %v984 = vadd.f32 %v947, %v983
    %985 = vdwg.mxu0
    %v986 = vmax.f32 %v972, 0.0
    %v987 = vmax.f32 %v976, 0.0
    %v988 = vmax.f32 %v980, 0.0
    %v989 = vmax.f32 %v984, 0.0
    %991 = vset.pattern.permute.xlu0 0
    %992 = vperm.xlu0 %991, %v43
    %v993 = vpop.permute.xlu0 %992
    %996 = vset.pattern.permute.xlu0 0
    %997 = vperm.xlu0 %996, %v44
    %v998 = vpop.permute.xlu0 %997
    %1001 = vset.pattern.permute.xlu0 0
    %1002 = vperm.xlu0 %1001, %v45
    %v1003 = vpop.permute.xlu0 %1002
    %1006 = vset.pattern.permute.xlu0 0
    %1007 = vperm.xlu0 %1006, %v46
    %v1008 = vpop.permute.xlu0 %1007
    %v1011 = vsel %vm71, %v27, 0
    %v1014 = vsel %vm71, %v28, 0
    %v1017 = vsel %vm71, %v29, 0
    %v1020 = vsel %vm71, %v30, 0
    %1022 = vmatpush.msra.mxu0 0.0
    %1023 = vmatpush.msra.mxu0 0.0
    %1024 = vmatpush.msra.mxu0 0.0
    %1025 = vmatpush.msra.mxu0 0.0
    %1026 = vmatpush.msra.mxu0 0.0
    %1027 = vmatpush.msra.mxu0 0.0
    %1028 = vmatpush.msra.mxu0 0.0
    %1029 = vmatpush.msra.mxu0 0.0
    %1030 = vmatpush.msra.mxu0 0.0
    %1031 = vmatpush.msra.mxu0 0.0
    %1032 = vmatpush.msra.mxu0 0.0
    %1033 = vmatpush.msra.mxu0 0.0
    %v1034 = vand.u32 %v989, 4294901760
    %1035 = vmatpush.msra.mxu0 %v1034
    %v1036 = vand.u32 %v988, 4294901760
    %1037 = vmatpush.msra.mxu0 %v1036
    %v1038 = vand.u32 %v987, 4294901760
    %1039 = vmatpush.msra.mxu0 %v1038
    %v1040 = vand.u32 %v986, 4294901760
    %1041 = vmatpush.msra.mxu0 %v1040
    %v1042 = vand.u32 %v1011, 4294901760
    %v1043 = vsub.f32 %v1011, %v1042
    %v1044 = vand.u32 %v1043, 4294901760
    %v1045 = vsub.f32 %v1043, %v1044
    %v1046 = vand.u32 %v1045, 4294901760
    %1047 = vmatmul.f32.gmra.mxu0 %v1046
    %v1048 = vpop.f32.mrf.mxu0
    %v1049 = vadd.f32 %v993, %v1048
    %v1050 = vand.u32 %v1014, 4294901760
    %v1051 = vsub.f32 %v1014, %v1050
    %v1052 = vand.u32 %v1051, 4294901760
    %v1053 = vsub.f32 %v1051, %v1052
    %v1054 = vand.u32 %v1053, 4294901760
    %1055 = vmatmul.f32.gmra.mxu0 %v1054
    %v1056 = vpop.f32.mrf.mxu0
    %v1057 = vadd.f32 %v998, %v1056
    %v1058 = vand.u32 %v1017, 4294901760
    %v1059 = vsub.f32 %v1017, %v1058
    %v1060 = vand.u32 %v1059, 4294901760
    %v1061 = vsub.f32 %v1059, %v1060
    %v1062 = vand.u32 %v1061, 4294901760
    %1063 = vmatmul.f32.gmra.mxu0 %v1062
    %v1064 = vpop.f32.mrf.mxu0
    %v1065 = vadd.f32 %v1003, %v1064
    %v1066 = vand.u32 %v1020, 4294901760
    %v1067 = vsub.f32 %v1020, %v1066
    %v1068 = vand.u32 %v1067, 4294901760
    %v1069 = vsub.f32 %v1067, %v1068
    %v1070 = vand.u32 %v1069, 4294901760
    %1071 = vmatmul.f32.gmra.mxu0 %v1070
    %v1072 = vpop.f32.mrf.mxu0
    %v1073 = vadd.f32 %v1008, %v1072
    %1074 = vdwg.mxu0
    %1075 = vmatpush.msra.mxu0 0.0
    %1076 = vmatpush.msra.mxu0 0.0
    %1077 = vmatpush.msra.mxu0 0.0
    %1078 = vmatpush.msra.mxu0 0.0
    %1079 = vmatpush.msra.mxu0 0.0
    %1080 = vmatpush.msra.mxu0 0.0
    %1081 = vmatpush.msra.mxu0 0.0
    %1082 = vmatpush.msra.mxu0 0.0
    %1083 = vmatpush.msra.mxu0 0.0
    %1084 = vmatpush.msra.mxu0 0.0
    %1085 = vmatpush.msra.mxu0 0.0
    %1086 = vmatpush.msra.mxu0 0.0
    %v1087 = vand.u32 %v989, 4294901760
    %v1088 = vsub.f32 %v989, %v1087
    %v1089 = vand.u32 %v1088, 4294901760
    %v1090 = vsub.f32 %v1088, %v1089
    %v1091 = vand.u32 %v1090, 4294901760
    %1092 = vmatpush.msra.mxu0 %v1091
    %v1093 = vand.u32 %v988, 4294901760
    %v1094 = vsub.f32 %v988, %v1093
    %v1095 = vand.u32 %v1094, 4294901760
    %v1096 = vsub.f32 %v1094, %v1095
    %v1097 = vand.u32 %v1096, 4294901760
    %1098 = vmatpush.msra.mxu0 %v1097
    %v1099 = vand.u32 %v987, 4294901760
    %v1100 = vsub.f32 %v987, %v1099
    %v1101 = vand.u32 %v1100, 4294901760
    %v1102 = vsub.f32 %v1100, %v1101
    %v1103 = vand.u32 %v1102, 4294901760
    %1104 = vmatpush.msra.mxu0 %v1103
    %v1105 = vand.u32 %v986, 4294901760
    %v1106 = vsub.f32 %v986, %v1105
    %v1107 = vand.u32 %v1106, 4294901760
    %v1108 = vsub.f32 %v1106, %v1107
    %v1109 = vand.u32 %v1108, 4294901760
    %1110 = vmatpush.msra.mxu0 %v1109
    %v1111 = vand.u32 %v1011, 4294901760
    %1112 = vmatmul.f32.gmra.mxu0 %v1111
    %v1113 = vpop.f32.mrf.mxu0
    %v1114 = vadd.f32 %v1049, %v1113
    %v1115 = vand.u32 %v1014, 4294901760
    %1116 = vmatmul.f32.gmra.mxu0 %v1115
    %v1117 = vpop.f32.mrf.mxu0
    %v1118 = vadd.f32 %v1057, %v1117
    %v1119 = vand.u32 %v1017, 4294901760
    %1120 = vmatmul.f32.gmra.mxu0 %v1119
    %v1121 = vpop.f32.mrf.mxu0
    %v1122 = vadd.f32 %v1065, %v1121
    %v1123 = vand.u32 %v1020, 4294901760
    %1124 = vmatmul.f32.gmra.mxu0 %v1123
    %v1125 = vpop.f32.mrf.mxu0
    %v1126 = vadd.f32 %v1073, %v1125
    %1127 = vdwg.mxu0
    %1128 = vmatpush.msra.mxu0 0.0
    %1129 = vmatpush.msra.mxu0 0.0
    %1130 = vmatpush.msra.mxu0 0.0
    %1131 = vmatpush.msra.mxu0 0.0
    %1132 = vmatpush.msra.mxu0 0.0
    %1133 = vmatpush.msra.mxu0 0.0
    %1134 = vmatpush.msra.mxu0 0.0
    %1135 = vmatpush.msra.mxu0 0.0
    %1136 = vmatpush.msra.mxu0 0.0
    %1137 = vmatpush.msra.mxu0 0.0
    %1138 = vmatpush.msra.mxu0 0.0
    %1139 = vmatpush.msra.mxu0 0.0
    %v1140 = vand.u32 %v989, 4294901760
    %v1141 = vsub.f32 %v989, %v1140
    %1142 = vmatpush.msra.mxu0 %v1141
    %v1143 = vand.u32 %v988, 4294901760
    %v1144 = vsub.f32 %v988, %v1143
    %1145 = vmatpush.msra.mxu0 %v1144
    %v1146 = vand.u32 %v987, 4294901760
    %v1147 = vsub.f32 %v987, %v1146
    %1148 = vmatpush.msra.mxu0 %v1147
    %v1149 = vand.u32 %v986, 4294901760
    %v1150 = vsub.f32 %v986, %v1149
    %1151 = vmatpush.msra.mxu0 %v1150
    %v1152 = vand.u32 %v1011, 4294901760
    %v1153 = vsub.f32 %v1011, %v1152
    %1154 = vmatmul.f32.gmra.mxu0 %v1153
    %v1155 = vpop.f32.mrf.mxu0
    %v1156 = vadd.f32 %v1114, %v1155
    %v1157 = vand.u32 %v1014, 4294901760
    %v1158 = vsub.f32 %v1014, %v1157
    %1159 = vmatmul.f32.gmra.mxu0 %v1158
    %v1160 = vpop.f32.mrf.mxu0
    %v1161 = vadd.f32 %v1118, %v1160
    %v1162 = vand.u32 %v1017, 4294901760
    %v1163 = vsub.f32 %v1017, %v1162
    %1164 = vmatmul.f32.gmra.mxu0 %v1163
    %v1165 = vpop.f32.mrf.mxu0
    %v1166 = vadd.f32 %v1122, %v1165
    %v1167 = vand.u32 %v1020, 4294901760
    %v1168 = vsub.f32 %v1020, %v1167
    %1169 = vmatmul.f32.gmra.mxu0 %v1168
    %v1170 = vpop.f32.mrf.mxu0
    %v1171 = vadd.f32 %v1126, %v1170
    %1172 = vdwg.mxu0
    %1173 = vmatpush.msra.mxu0 0.0
    %1174 = vmatpush.msra.mxu0 0.0
    %1175 = vmatpush.msra.mxu0 0.0
    %1176 = vmatpush.msra.mxu0 0.0
    %1177 = vmatpush.msra.mxu0 0.0
    %1178 = vmatpush.msra.mxu0 0.0
    %1179 = vmatpush.msra.mxu0 0.0
    %1180 = vmatpush.msra.mxu0 0.0
    %1181 = vmatpush.msra.mxu0 0.0
    %1182 = vmatpush.msra.mxu0 0.0
    %1183 = vmatpush.msra.mxu0 0.0
    %1184 = vmatpush.msra.mxu0 0.0
    %v1185 = vand.u32 %v989, 4294901760
    %1186 = vmatpush.msra.mxu0 %v1185
    %v1187 = vand.u32 %v988, 4294901760
    %1188 = vmatpush.msra.mxu0 %v1187
    %v1189 = vand.u32 %v987, 4294901760
    %1190 = vmatpush.msra.mxu0 %v1189
    %v1191 = vand.u32 %v986, 4294901760
    %1192 = vmatpush.msra.mxu0 %v1191
    %v1193 = vand.u32 %v1011, 4294901760
    %v1194 = vsub.f32 %v1011, %v1193
    %v1195 = vand.u32 %v1194, 4294901760
    %1196 = vmatmul.f32.gmra.mxu0 %v1195
    %v1197 = vpop.f32.mrf.mxu0
    %v1198 = vadd.f32 %v1156, %v1197
    %v1199 = vand.u32 %v1014, 4294901760
    %v1200 = vsub.f32 %v1014, %v1199
    %v1201 = vand.u32 %v1200, 4294901760
    %1202 = vmatmul.f32.gmra.mxu0 %v1201
    %v1203 = vpop.f32.mrf.mxu0
    %v1204 = vadd.f32 %v1161, %v1203
    %v1205 = vand.u32 %v1017, 4294901760
    %v1206 = vsub.f32 %v1017, %v1205
    %v1207 = vand.u32 %v1206, 4294901760
    %1208 = vmatmul.f32.gmra.mxu0 %v1207
    %v1209 = vpop.f32.mrf.mxu0
    %v1210 = vadd.f32 %v1166, %v1209
    %v1211 = vand.u32 %v1020, 4294901760
    %v1212 = vsub.f32 %v1020, %v1211
    %v1213 = vand.u32 %v1212, 4294901760
    %1214 = vmatmul.f32.gmra.mxu0 %v1213
    %v1215 = vpop.f32.mrf.mxu0
    %v1216 = vadd.f32 %v1171, %v1215
    %1217 = vdwg.mxu0
    %1218 = vmatpush.msra.mxu0 0.0
    %1219 = vmatpush.msra.mxu0 0.0
    %1220 = vmatpush.msra.mxu0 0.0
    %1221 = vmatpush.msra.mxu0 0.0
    %1222 = vmatpush.msra.mxu0 0.0
    %1223 = vmatpush.msra.mxu0 0.0
    %1224 = vmatpush.msra.mxu0 0.0
    %1225 = vmatpush.msra.mxu0 0.0
    %1226 = vmatpush.msra.mxu0 0.0
    %1227 = vmatpush.msra.mxu0 0.0
    %1228 = vmatpush.msra.mxu0 0.0
    %1229 = vmatpush.msra.mxu0 0.0
    %v1230 = vand.u32 %v989, 4294901760
    %v1231 = vsub.f32 %v989, %v1230
    %v1232 = vand.u32 %v1231, 4294901760
    %1233 = vmatpush.msra.mxu0 %v1232
    %v1234 = vand.u32 %v988, 4294901760
    %v1235 = vsub.f32 %v988, %v1234
    %v1236 = vand.u32 %v1235, 4294901760
    %1237 = vmatpush.msra.mxu0 %v1236
    %v1238 = vand.u32 %v987, 4294901760
    %v1239 = vsub.f32 %v987, %v1238
    %v1240 = vand.u32 %v1239, 4294901760
    %1241 = vmatpush.msra.mxu0 %v1240
    %v1242 = vand.u32 %v986, 4294901760
    %v1243 = vsub.f32 %v986, %v1242
    %v1244 = vand.u32 %v1243, 4294901760
    %1245 = vmatpush.msra.mxu0 %v1244
    %v1246 = vand.u32 %v1011, 4294901760
    %1247 = vmatmul.f32.gmra.mxu0 %v1246
    %v1248 = vpop.f32.mrf.mxu0
    %v1249 = vadd.f32 %v1198, %v1248
    %v1250 = vand.u32 %v1014, 4294901760
    %1251 = vmatmul.f32.gmra.mxu0 %v1250
    %v1252 = vpop.f32.mrf.mxu0
    %v1253 = vadd.f32 %v1204, %v1252
    %v1254 = vand.u32 %v1017, 4294901760
    %1255 = vmatmul.f32.gmra.mxu0 %v1254
    %v1256 = vpop.f32.mrf.mxu0
    %v1257 = vadd.f32 %v1210, %v1256
    %v1258 = vand.u32 %v1020, 4294901760
    %1259 = vmatmul.f32.gmra.mxu0 %v1258
    %v1260 = vpop.f32.mrf.mxu0
    %v1261 = vadd.f32 %v1216, %v1260
    %1262 = vdwg.mxu0
    %1263 = vmatpush.msra.mxu0 0.0
    %1264 = vmatpush.msra.mxu0 0.0
    %1265 = vmatpush.msra.mxu0 0.0
    %1266 = vmatpush.msra.mxu0 0.0
    %1267 = vmatpush.msra.mxu0 0.0
    %1268 = vmatpush.msra.mxu0 0.0
    %1269 = vmatpush.msra.mxu0 0.0
    %1270 = vmatpush.msra.mxu0 0.0
    %1271 = vmatpush.msra.mxu0 0.0
    %1272 = vmatpush.msra.mxu0 0.0
    %1273 = vmatpush.msra.mxu0 0.0
    %1274 = vmatpush.msra.mxu0 0.0
    %v1275 = vand.u32 %v989, 4294901760
    %1276 = vmatpush.msra.mxu0 %v1275
    %v1277 = vand.u32 %v988, 4294901760
    %1278 = vmatpush.msra.mxu0 %v1277
    %v1279 = vand.u32 %v987, 4294901760
    %1280 = vmatpush.msra.mxu0 %v1279
    %v1281 = vand.u32 %v986, 4294901760
    %1282 = vmatpush.msra.mxu0 %v1281
    %v1283 = vand.u32 %v1011, 4294901760
    %1284 = vmatmul.f32.gmra.mxu0 %v1283
    %v1285 = vpop.f32.mrf.mxu0
    %v1286 = vadd.f32 %v1249, %v1285
    %v1287 = vand.u32 %v1014, 4294901760
    %1288 = vmatmul.f32.gmra.mxu0 %v1287
    %v1289 = vpop.f32.mrf.mxu0
    %v1290 = vadd.f32 %v1253, %v1289
    %v1291 = vand.u32 %v1017, 4294901760
    %1292 = vmatmul.f32.gmra.mxu0 %v1291
    %v1293 = vpop.f32.mrf.mxu0
    %v1294 = vadd.f32 %v1257, %v1293
    %v1295 = vand.u32 %v1020, 4294901760
    %1296 = vmatmul.f32.gmra.mxu0 %v1295
    %v1297 = vpop.f32.mrf.mxu0
    %v1298 = vadd.f32 %v1261, %v1297
    %1299 = vdwg.mxu0
    %v1300 = vtanh.pop %v1286
    %v1301 = vtanh.pop %v1290
    %v1302 = vtanh.pop %v1294
    %v1303 = vtanh.pop %v1298
    %1304 = vst [vmem:[#allocation2] sm:$0xff] %v1300
    %1305 = vst [vmem:[#allocation2 + $0x8] sm:$0xff] %v1301
    %1306 = vst [vmem:[#allocation2 + $0x10] sm:$0xff] %v1302
    %1307 = vst [vmem:[#allocation2 + $0x18] sm:$0xff] %v1303
    // Predicated region
    $region14: #{tpu_custom_call.1} parent=1 // pred_check
      _
    $region15: #{tpu_custom_call.1} parent=1 // pred_check_branch
      %1309 = sbr.rel (0) target = $region17
    $region16: #{tpu_custom_call.1} parent=1 // pred_region
      %1311 = vsyncadd [#allocation3], 0
      %s1312 = sshll.u32 [#allocation2], 4
      %s1313 = int_to_ptr.vmem [resolvable:$true] %s1312
      %s1314 = sshll.u32 %s3, 4
      %s1315 = int_to_ptr.hbm [resolvable:$true] %s1314
      %1320 = dma.vmem_to_hbm [thread:$0]  %s1313, 512, %s1315, [#allocation3], 128, 128, 8
    $region17: #{tpu_custom_call.1} parent=1 // pred_fallthru
      _
    // Predicated region
    $region18: #{tpu_custom_call.1} parent=1 // pred_check
      _
    $region19: #{tpu_custom_call.1} parent=1 // pred_check_branch
      %1322 = sbr.rel (0) target = $region21
    $region20: #{tpu_custom_call.1} parent=1 // pred_region
      %1324 = dma.done [#allocation3], 512
    $region21: #{tpu_custom_call.1} parent=1 // pred_fallthru
      _
    %1325 = vsyncpa [#allocation3], 1

</llo_original>
